<compile_context>
chip_gen: v6e
topology: v6e:2x2x1
jax: 0.10.0
libtpu: 0.0.40
codegen_flags: <defaults>
</compile_context>

<pallas_src>
import functools

import jax
import jax.numpy as jnp
from jax.experimental import pallas as pl
from jax.experimental.pallas import tpu as pltpu


def _round_up(x, m):
    return (x + m - 1) // m * m


_VMEM_STAGE_LIMIT_BYTES = 32 * 1024 * 1024  # scoped-vmem request for the staged path


def _vmem_budget_bytes():
    """Generation-aware budget for staging the table in VMEM (conservative)."""
    cap = 64 * 1024 * 1024  # v7x worst case (64 MiB / TensorCore)
    try:
        info = pltpu.get_tpu_info()
        cap = int(getattr(info, "vmem_capacity_bytes", cap))
    except Exception:
        pass
    # Leave room for double-buffered output blocks + compiler scratch.
    return min(cap // 3, 24 * 1024 * 1024)


# --------------------------------------------------------------------------- #
# Path 1: table staged in VMEM, in-VMEM row gather.
# --------------------------------------------------------------------------- #
def _vmem_gather_kernel(ids_ref, table_ref, out_ref):
    # ids_ref:   (n_pad,) int32, SMEM (scalar prefetch) -- row indices
    # table_ref: (V1, Dp) VMEM                          -- whole embedding table
    # out_ref:   (tm, Dp) VMEM                          -- gathered rows (this tile)
    tm = out_ref.shape[0]
    base = pl.program_id(0) * tm

    def copy_row(j, carry):
        row = ids_ref[base + j]
        out_ref[pl.ds(j, 1), :] = table_ref[pl.ds(row, 1), :]
        return carry

    jax.lax.fori_loop(0, tm, copy_row, 0, unroll=min(8, tm))


# --------------------------------------------------------------------------- #
# Path 2: table stays in HBM, per-row DMA gather into the output block.
# --------------------------------------------------------------------------- #
def _hbm_gather_kernel(ids_ref, table_hbm, out_ref, sem):
    # ids_ref:   (n_pad,) int32, SMEM (scalar prefetch)
    # table_hbm: (V1, Dp) HBM (pl.ANY)
    # out_ref:   (tm, Dp) VMEM (pipelined output block)
    # sem:       (n_chunks,) DMA-completion semaphores
    tm = out_ref.shape[0]
    base = pl.program_id(0) * tm
    n_chunks = sem.shape[0]           # static (1 or 2)
    chunk = tm // n_chunks

    def issue_chunk(c):
        def issue(j, carry):
            row = ids_ref[base + c * chunk + j]
            pltpu.make_async_copy(
                table_hbm.at[pl.ds(row, 1), :],          # (1, Dp) row in HBM
                out_ref.at[pl.ds(c * chunk + j, 1), :],  # (1, Dp) slot in out block
                sem.at[c],
            ).start()
            return carry

        jax.lax.fori_loop(0, chunk, issue, 0, unroll=min(8, chunk))

    def drain_chunk(c):
        # Single byte-counted wait per chunk: every issued copy is (1, Dp), so
        # one (chunk, Dp)-sized descriptor drains all `chunk` copies at once.
        pltpu.make_async_copy(
            table_hbm.at[pl.ds(0, chunk), :],
            out_ref.at[pl.ds(c * chunk, chunk), :],
            sem.at[c],
        ).wait()

    for c in range(n_chunks):     # static Python loop (n_chunks is 1 or 2)
        issue_chunk(c)
    for c in range(n_chunks):
        drain_chunk(c)


# --------------------------------------------------------------------------- #
# Wrapper (== WordEmbedding.forward with dropout p = 0).
# --------------------------------------------------------------------------- #
@functools.partial(jax.jit, static_argnames=("tm", "force_hbm_gather"))
def word_embedding_forward(x, table, *, tm=None, force_hbm_gather=False):
    B, S = x.shape
    V1, D = table.shape
    N = B * S
    itemsize = jnp.dtype(table.dtype).itemsize

    # Lane-dense output: pad D to a multiple of 128 (sliced off at the end).
    Dp = _round_up(D, 128)
    if Dp != D:
        table = jnp.pad(table, ((0, 0), (0, Dp - D)))

    # Clamp like jnp.take (PyTorch raises on OOB ids) so indexing stays in-bounds.
    ids = jnp.clip(x.reshape(N).astype(jnp.int32), 0, V1 - 1)

    # Tile size: 128-512 rows/step at real token counts; at tiny N keep >= 2
    # grid steps (both v7x TensorCores busy).  tm is always a multiple of 8.
    if tm is None:
        tm = max(8, min(512, _round_up(max(N // 2, 1), 8)))
    n_pad = _round_up(N, tm)
    if n_pad != N:
        # Pad with the padding row (padding_idx == V1 - 1); padded rows are dropped.
        ids = jnp.concatenate([ids, jnp.full((n_pad - N,), V1 - 1, dtype=jnp.int32)])

    grid = (n_pad // tm,)
    out_shape = jax.ShapeDtypeStruct((n_pad, Dp), table.dtype)
    cost = pl.CostEstimate(
        flops=0,
        transcendentals=0,
        bytes_accessed=int(2 * n_pad * Dp * itemsize + n_pad * 4),
    )

    # TODO(synk): at very large N, pass ids as a per-tile SMEM block instead of
    # scalar-prefetching the whole array (1-D SMEM pads to next_pow2(4N) bytes).

    table_bytes = V1 * Dp * itemsize
    # Conservative VMEM need: table (assume double-buffered) + out double buffers.
    vmem_need = 2 * table_bytes + 4 * tm * Dp * itemsize + (1 << 20)
    use_vmem_path = (not force_hbm_gather) and (vmem_need <= _vmem_budget_bytes())

    if use_vmem_path:
        out_flat = pl.pallas_call(
            _vmem_gather_kernel,
            out_shape=out_shape,
            grid_spec=pltpu.PrefetchScalarGridSpec(
                num_scalar_prefetch=1,                                   # ids -> SMEM
                grid=grid,
                in_specs=[pl.BlockSpec((V1, Dp), lambda i, _ids: (0, 0))],  # whole table, fetched once
                out_specs=pl.BlockSpec((tm, Dp), lambda i, _ids: (i, 0)),
            ),
            compiler_params=pltpu.CompilerParams(
                dimension_semantics=("parallel",),
                vmem_limit_bytes=_VMEM_STAGE_LIMIT_BYTES,
            ),
            cost_estimate=cost,
        )(ids, table)
    else:
        n_chunks = 2 if tm >= 256 else 1
        out_flat = pl.pallas_call(
            _hbm_gather_kernel,
            out_shape=out_shape,
            grid_spec=pltpu.PrefetchScalarGridSpec(
                num_scalar_prefetch=1,                          # ids -> SMEM
                grid=grid,
                in_specs=[pl.BlockSpec(memory_space=pl.ANY)],   # table stays in HBM
                out_specs=pl.BlockSpec((tm, Dp), lambda i, _ids: (i, 0)),
                scratch_shapes=[pltpu.SemaphoreType.DMA((n_chunks,))],
            ),
            compiler_params=pltpu.CompilerParams(
                dimension_semantics=("parallel",),
            ),
            cost_estimate=cost,
        )(ids, table)

    # TODO(synk): training-mode dropout (p > 0) would seed pltpu.prng_seed with
    # (seed, pl.program_id(0)) per tile and mask via pltpu.prng_random_bits;
    # module default p = 0 is the identity.
    return out_flat[:N, :D].reshape(B, S, D)


if __name__ == "__main__":
    ntoken = 255      # vocab size; row `ntoken` is the padding row (padding_idx)
    emb_dim = 128
    B, S = 2, 8

    key = jax.random.PRNGKey(0)
    k_tab, k_ids = jax.random.split(key)

    # nn.Embedding-like init with the padding row explicitly zeroed.
    table = jax.random.normal(k_tab, (ntoken + 1, emb_dim), dtype=jnp.float32)
    table = table.at[ntoken].set(0.0)

    # Token ids in [0, ntoken] inclusive (some hit the padding index).
    x = jax.random.randint(k_ids, (B, S), 0, ntoken + 1, dtype=jnp.int32)

    ref = jnp.take(table, x, axis=0)

    # Path 1: VMEM-staged gather (table is 128 KiB -> trivially resident).
    out = jax.block_until_ready(word_embedding_forward(x, table))
    assert out.shape == (B, S, emb_dim)
    assert jnp.allclose(out, ref), "VMEM-staged path mismatch vs reference gather"

    # Path 2: HBM row-gather (forced, exercises the large-table path too).
    out_hbm = jax.block_until_ready(word_embedding_forward(x, table, force_hbm_gather=True))
    assert jnp.allclose(out_hbm, ref), "HBM-gather path mismatch vs reference gather"

    print("KERNEL_OK")
</pallas_src>

<mosaic_0001>
module attributes {stable_mosaic.version = 11 : i64} {
  func.func @_vmem_gather_kernel(%arg0: i32, %arg1: memref<16xi32, #tpu.memory_space<smem>>, %arg2: memref<256x128xf32, #tpu.memory_space<vmem>>, %arg3: memref<8x128xf32, #tpu.memory_space<vmem>>) attributes {dimension_semantics = [#tpu.dimension_semantics<parallel>], iteration_bounds = array<i64: 2>, scalar_prefetch = 1 : i64, scratch_operands = 0 : i64, tpu.core_type = #tpu.core_type<tc>, window_params = [{pipeline_mode = #tpu.pipeline_mode<synchronous>, transform_indices = @transform_0, window_bounds = array<i64: 256, 128>}, {transform_indices = @transform_1, window_bounds = array<i64: 8, 128>}]} {
    %c8_i32 = arith.constant 8 : i32
    %0 = arith.muli %arg0, %c8_i32 : i32
    %c0_i32 = arith.constant 0 : i32
    %1 = arith.addi %0, %c0_i32 : i32
    %2 = arith.index_cast %1 : i32 to index
    %3 = memref.load %arg1[%2] : memref<16xi32, #tpu.memory_space<smem>>
    %4 = arith.index_cast %3 : i32 to index
    %c0 = arith.constant 0 : index
    %5 = vector.load %arg2[%4, %c0] : memref<256x128xf32, #tpu.memory_space<vmem>>, vector<1x128xf32>
    %6 = arith.index_cast %c0_i32 : i32 to index
    %c0_0 = arith.constant 0 : index
    %7 = vector.load %arg3[%6, %c0_0] : memref<8x128xf32, #tpu.memory_space<vmem>>, vector<1x128xf32>
    tpu.vector_store %arg3[%6, %c0_0], %5 {strides = array<i32>} : memref<8x128xf32, #tpu.memory_space<vmem>>, vector<1x128xf32>,
    %c1_i32 = arith.constant 1 : i32
    %8 = arith.addi %0, %c1_i32 : i32
    %9 = arith.index_cast %8 : i32 to index
    %10 = memref.load %arg1[%9] : memref<16xi32, #tpu.memory_space<smem>>
    %11 = arith.index_cast %10 : i32 to index
    %c0_1 = arith.constant 0 : index
    %12 = vector.load %arg2[%11, %c0_1] : memref<256x128xf32, #tpu.memory_space<vmem>>, vector<1x128xf32>
    %13 = arith.index_cast %c1_i32 : i32 to index
    %c0_2 = arith.constant 0 : index
    %14 = vector.load %arg3[%13, %c0_2] : memref<8x128xf32, #tpu.memory_space<vmem>>, vector<1x128xf32>
    tpu.vector_store %arg3[%13, %c0_2], %12 {strides = array<i32>} : memref<8x128xf32, #tpu.memory_space<vmem>>, vector<1x128xf32>,
    %c2_i32 = arith.constant 2 : i32
    %15 = arith.addi %0, %c2_i32 : i32
    %16 = arith.index_cast %15 : i32 to index
    %17 = memref.load %arg1[%16] : memref<16xi32, #tpu.memory_space<smem>>
    %18 = arith.index_cast %17 : i32 to index
    %c0_3 = arith.constant 0 : index
    %19 = vector.load %arg2[%18, %c0_3] : memref<256x128xf32, #tpu.memory_space<vmem>>, vector<1x128xf32>
    %20 = arith.index_cast %c2_i32 : i32 to index
    %c0_4 = arith.constant 0 : index
    %21 = vector.load %arg3[%20, %c0_4] : memref<8x128xf32, #tpu.memory_space<vmem>>, vector<1x128xf32>
    tpu.vector_store %arg3[%20, %c0_4], %19 {strides = array<i32>} : memref<8x128xf32, #tpu.memory_space<vmem>>, vector<1x128xf32>,
    %c3_i32 = arith.constant 3 : i32
    %22 = arith.addi %0, %c3_i32 : i32
    %23 = arith.index_cast %22 : i32 to index
    %24 = memref.load %arg1[%23] : memref<16xi32, #tpu.memory_space<smem>>
    %25 = arith.index_cast %24 : i32 to index
    %c0_5 = arith.constant 0 : index
    %26 = vector.load %arg2[%25, %c0_5] : memref<256x128xf32, #tpu.memory_space<vmem>>, vector<1x128xf32>
    %27 = arith.index_cast %c3_i32 : i32 to index
    %c0_6 = arith.constant 0 : index
    %28 = vector.load %arg3[%27, %c0_6] : memref<8x128xf32, #tpu.memory_space<vmem>>, vector<1x128xf32>
    tpu.vector_store %arg3[%27, %c0_6], %26 {strides = array<i32>} : memref<8x128xf32, #tpu.memory_space<vmem>>, vector<1x128xf32>,
    %c4_i32 = arith.constant 4 : i32
    %29 = arith.addi %0, %c4_i32 : i32
    %30 = arith.index_cast %29 : i32 to index
    %31 = memref.load %arg1[%30] : memref<16xi32, #tpu.memory_space<smem>>
    %32 = arith.index_cast %31 : i32 to index
    %c0_7 = arith.constant 0 : index
    %33 = vector.load %arg2[%32, %c0_7] : memref<256x128xf32, #tpu.memory_space<vmem>>, vector<1x128xf32>
    %34 = arith.index_cast %c4_i32 : i32 to index
    %c0_8 = arith.constant 0 : index
    %35 = vector.load %arg3[%34, %c0_8] : memref<8x128xf32, #tpu.memory_space<vmem>>, vector<1x128xf32>
    tpu.vector_store %arg3[%34, %c0_8], %33 {strides = array<i32>} : memref<8x128xf32, #tpu.memory_space<vmem>>, vector<1x128xf32>,
    %c5_i32 = arith.constant 5 : i32
    %36 = arith.addi %0, %c5_i32 : i32
    %37 = arith.index_cast %36 : i32 to index
    %38 = memref.load %arg1[%37] : memref<16xi32, #tpu.memory_space<smem>>
    %39 = arith.index_cast %38 : i32 to index
    %c0_9 = arith.constant 0 : index
    %40 = vector.load %arg2[%39, %c0_9] : memref<256x128xf32, #tpu.memory_space<vmem>>, vector<1x128xf32>
    %41 = arith.index_cast %c5_i32 : i32 to index
    %c0_10 = arith.constant 0 : index
    %42 = vector.load %arg3[%41, %c0_10] : memref<8x128xf32, #tpu.memory_space<vmem>>, vector<1x128xf32>
    tpu.vector_store %arg3[%41, %c0_10], %40 {strides = array<i32>} : memref<8x128xf32, #tpu.memory_space<vmem>>, vector<1x128xf32>,
    %c6_i32 = arith.constant 6 : i32
    %43 = arith.addi %0, %c6_i32 : i32
    %44 = arith.index_cast %43 : i32 to index
    %45 = memref.load %arg1[%44] : memref<16xi32, #tpu.memory_space<smem>>
    %46 = arith.index_cast %45 : i32 to index
    %c0_11 = arith.constant 0 : index
    %47 = vector.load %arg2[%46, %c0_11] : memref<256x128xf32, #tpu.memory_space<vmem>>, vector<1x128xf32>
    %48 = arith.index_cast %c6_i32 : i32 to index
    %c0_12 = arith.constant 0 : index
    %49 = vector.load %arg3[%48, %c0_12] : memref<8x128xf32, #tpu.memory_space<vmem>>, vector<1x128xf32>
    tpu.vector_store %arg3[%48, %c0_12], %47 {strides = array<i32>} : memref<8x128xf32, #tpu.memory_space<vmem>>, vector<1x128xf32>,
    %c7_i32 = arith.constant 7 : i32
    %50 = arith.addi %0, %c7_i32 : i32
    %51 = arith.index_cast %50 : i32 to index
    %52 = memref.load %arg1[%51] : memref<16xi32, #tpu.memory_space<smem>>
    %53 = arith.index_cast %52 : i32 to index
    %c0_13 = arith.constant 0 : index
    %54 = vector.load %arg2[%53, %c0_13] : memref<256x128xf32, #tpu.memory_space<vmem>>, vector<1x128xf32>
    %55 = arith.index_cast %c7_i32 : i32 to index
    %c0_14 = arith.constant 0 : index
    %56 = vector.load %arg3[%55, %c0_14] : memref<8x128xf32, #tpu.memory_space<vmem>>, vector<1x128xf32>
    tpu.vector_store %arg3[%55, %c0_14], %54 {strides = array<i32>} : memref<8x128xf32, #tpu.memory_space<vmem>>, vector<1x128xf32>,
    %c8_i32_15 = arith.constant 8 : i32
    return
  }
  func.func @transform_0(%arg0: i32, %arg1: memref<16xi32, #tpu.memory_space<smem>>) -> (i32, i32) {
    %c0_i32 = arith.constant 0 : i32
    %c0_i32_0 = arith.constant 0 : i32
    %c0_i32_1 = arith.constant 0 : i32
    return %c0_i32, %c0_i32_0 : i32, i32
  }
  func.func @transform_1(%arg0: i32, %arg1: memref<16xi32, #tpu.memory_space<smem>>) -> (i32, i32) {
    %c0_i32 = arith.constant 0 : i32
    %c0_i32_0 = arith.constant 0 : i32
    return %arg0, %c0_i32 : i32, i32
  }
}

</mosaic_0001>

<llo_original>
// kernel: word_embedding_forward.1
$region0: #{word_embedding_forward.1}
  #allocation0 [shape = 'u32[]', space=smem, size = 0x4, offset = 0x4, fixed_abs, tag = 'smem constant byte address 0x4 - core index']
  #allocation1 [shape = 'u32[144,128]{1,0:T(1,128)}', space=vmem, size = 0x12000, scoped, tag = 'internal scratch']
  #allocation2 [shape = 's32[1]{0}', space=sflag, size = 0x4, scoped, tag = 'scoped memory for word_embedding_forward.1']
  #allocation3 [shape = 'u8[512]{0}', space=smem, size = 0x200, scoped, tag = 'prefetched SMEM operand 0']
  %s0 = inlined_call_operand.vmem [shape: s32[16], index: 0, kind: input, shape index: {}]
  %s1 = inlined_call_operand.hbm [shape: f32[256,128], index: 1, kind: input, shape index: {}]
  %s2 = inlined_call_operand.hbm [shape: f32[16,128], index: 2, kind: output, shape index: {}]
  %s3 = sld [smem:[#allocation0]]
  $region41: #{word_embedding_forward.1} parent=0
    _
  %s5 = ssub.s32 1, %s3
  %s6 = scalar_select 0, %s5, %s3
  %s7 = sshll.u32 %s0, 4
  %s8 = int_to_ptr.vmem [resolvable:$true] %s7
  %10 = dma.vmem_to_smem %s8, 16, [#allocation3], [#allocation2]
  %11 = dma.done [#allocation2], 16
  %12 = sfence
  $region1: #{word_embedding_forward.1} parent=0
    #allocation4 [shape = 'u8[131072]{0}', space=vmem, size = 0x20000, scoped, tag = 'input window, operand 1, single buffered']
    #allocation5 [shape = 's32[2]{0}', space=sflag, size = 0x8, scoped, tag = 'scoped memory for word_embedding_forward.1']
    #allocation6 [shape = 's32[2]{0}', space=sflag, size = 0x8, scoped, tag = 'scoped memory for word_embedding_forward.1']
    #allocation7 [shape = 'u8[8192]{0}', space=vmem, size = 0x2000, scoped, tag = 'output window, operand 0']
    %13 = vsyncpa [#allocation5], 0
    %14 = vsyncpa [#allocation6], 0
    %s15 = scalar_lea.sflag [#allocation6], 1
    %16 = vsyncpa %s15, 0
    loop: start=0, step=1, limit=4
    $region2: #{word_embedding_forward.1} parent=1 // loop_pre_header
      _
    $region3: #{word_embedding_forward.1} parent=1 // loop_header
      %s18 = sphi 0, %s22
      %p19 = scmp.ge.s32.totalorder %s18, 4
      %s26 = sphi 0, %s26
      %s28 = sphi 0, %s26
      %s29 = sphi 0, %s28
      %s43 = sphi 0, %s29
      %s49 = sphi 0, %s51
      %s52 = sphi 0, %s49
      %s53 = sphi 0, %s52
      %s69 = sphi 0, %s53
    $region4: #{word_embedding_forward.1} parent=1 // loop_header_branch
      %21 = sbr.rel (%p19) target = $region8
    $region5: #{word_embedding_forward.1} parent=1 // loop_body
      %s23 = ssub.s32 %s18, 1
      %s24 = ssub.s32 %s18, 2
      %s25 = sadd.s32 %s18, 1
      %s27 = sadd.s32 %s26, 1
      %p30 = scmp.eq.s32.totalorder %s18, 1
      %p31 = scmp.ne.s32.totalorder %s26, %s28
      %p32 = scmp.eq.s32.totalorder %s18, 0
      %p33 = por %p31, %p32
      %p34 = scmp.ne.s32.totalorder %s26, %s28
      %p35 = scmp.eq.s32.totalorder %s23, 1
      %p36 = por %p34, %p35
      %p37 = scmp.ne.s32.totalorder %s28, %s29
      %p38 = scmp.eq.s32.totalorder %s23, 0
      %p39 = por %p37, %p38
      %p40 = scmp.ne.s32.totalorder %s28, %s29
      %p41 = scmp.eq.s32.totalorder %s24, 1
      %p42 = por %p40, %p41
      %p44 = scmp.ne.s32.totalorder %s29, %s43
      %p45 = scmp.eq.s32.totalorder %s24, 0
      %p46 = por %p44, %p45
      %s47 = ssub.s32 %s18, %s25
      %p48 = scmp.eq.s32.totalorder %s47, 0
      %s50 = sadd.s32 %s49, 1
      %s51 = scalar_select %p48, %s49, %s50
      %p54 = pneg %p48
      %p55 = scmp.eq.s32.totalorder %s18, 1
      %p56 = por %p54, %p55
      %p57 = scmp.ne.s32.totalorder %s49, %s52
      %p58 = scmp.eq.s32.totalorder %s18, 0
      %p59 = por %p57, %p58
      %p60 = scmp.ne.s32.totalorder %s49, %s52
      %p61 = scmp.eq.s32.totalorder %s23, 1
      %p62 = por %p60, %p61
      %p63 = scmp.ne.s32.totalorder %s52, %s53
      %p64 = scmp.eq.s32.totalorder %s23, 0
      %p65 = por %p63, %p64
      %p66 = scmp.ne.s32.totalorder %s52, %s53
      %p67 = scmp.eq.s32.totalorder %s24, 1
      %p68 = por %p66, %p67
      %p70 = scmp.ne.s32.totalorder %s53, %s69
      %p71 = scmp.eq.s32.totalorder %s24, 0
      %p72 = por %p70, %p71
      %p73 = scmp.le.s32.totalorder 1, %s18
      %p74 = scmp.lt.s32.totalorder %s18, 3
      %p75 = pnand %p73, %p74
      %p76 = pneg %p75
      // Predicated region
      $region9: #{word_embedding_forward.1} parent=5 // pred_check
        _
      $region10: #{word_embedding_forward.1} parent=5 // pred_check_branch
        %78 = sbr.rel (%p75) target = $region12
      $region11: #{word_embedding_forward.1} parent=5 // pred_region
        %s79 = ssub.s32 %s18, 1
        // Predicated region
        $region13: #{word_embedding_forward.1} parent=11 // pred_check
          %p80 = pneg %p39
        $region14: #{word_embedding_forward.1} parent=11 // pred_check_branch
          %82 = sbr.rel (%p80) target = $region16
        $region15: #{word_embedding_forward.1} parent=11 // pred_region
          %s84 = ssub.s32 4096, 4096
          %85 = vsyncadd [#allocation5], %s84
          %s86 = sshll.u32 [#allocation4], 4
          %s87 = int_to_ptr.vmem [resolvable:$true] %s86
          %92 = dma.hbm_to_vmem [thread:$0]  %s1, 4096, %s87, [#allocation5], 128, 128, 8
        $region16: #{word_embedding_forward.1} parent=11 // pred_fallthru
          _
      $region12: #{word_embedding_forward.1} parent=5 // pred_fallthru
        _
      %p93 = scmp.lt.s32.totalorder %s18, 2
      // Predicated region
      $region17: #{word_embedding_forward.1} parent=5 // pred_check
        %p94 = pneg %p93
      $region18: #{word_embedding_forward.1} parent=5 // pred_check_branch
        %96 = sbr.rel (%p94) target = $region20
      $region19: #{word_embedding_forward.1} parent=5 // pred_region
        _
      $region20: #{word_embedding_forward.1} parent=5 // pred_fallthru
        _
      %p97 = scmp.le.s32.totalorder 1, %s18
      %p98 = scmp.lt.s32.totalorder %s18, 3
      %p99 = pnand %p97, %p98
      %p100 = pneg %p99
      // Predicated region
      $region21: #{word_embedding_forward.1} parent=5 // pred_check
        _
      $region22: #{word_embedding_forward.1} parent=5 // pred_check_branch
        %102 = sbr.rel (%p99) target = $region24
      $region23: #{word_embedding_forward.1} parent=5 // pred_region
        %s103 = ssub.s32 %s18, 1
        // Predicated region
        $region25: #{word_embedding_forward.1} parent=23 // pred_check
          %p104 = pneg %p39
        $region26: #{word_embedding_forward.1} parent=23 // pred_check_branch
          %106 = sbr.rel (%p104) target = $region28
        $region27: #{word_embedding_forward.1} parent=23 // pred_region
          %107 = dma.done [#allocation5], 4096
        $region28: #{word_embedding_forward.1} parent=23 // pred_fallthru
          _
        %p108 = pneg %p39
        %p109 = pneg %p36
        %p110 = pneg %p65
        %p111 = pneg %p62
        %s112 = sand.u32 %s52, 1
        %s113 = scalar_lea.sflag [#allocation6], %s112
        %s114 = sand.u32 %s52, 1
        %s115 = smul.addr %s114, 8
        %s116 = scalar_lea.vmem [#allocation7], %s115
        %s117 = smul.u32 %s23, 8
        %s118 = sld [smem:[#allocation3 + %s117]]
        %s119 = scalar_lea.vmem [#allocation4], %s118
        %v120 = vld [vmem:[%s119] sm:$0x1]
        %121 = vst [vmem:[%s116] sm:$0x1] %v120
        %s122 = sadd.s32 %s117, 1
        %s123 = sld [smem:[#allocation3 + %s122]]
        %s124 = scalar_lea.vmem [#allocation4], %s123
        %v125 = vld [vmem:[%s124] sm:$0x1]
        %126 = vst [vmem:[%s116 + $0x1] sm:$0x1] %v125
        %s127 = sadd.s32 %s117, 2
        %s128 = sld [smem:[#allocation3 + %s127]]
        %s129 = scalar_lea.vmem [#allocation4], %s128
        %v130 = vld [vmem:[%s129] sm:$0x1]
        %131 = vst [vmem:[%s116 + $0x2] sm:$0x1] %v130
        %s132 = sadd.s32 %s117, 3
        %s133 = sld [smem:[#allocation3 + %s132]]
        %s134 = scalar_lea.vmem [#allocation4], %s133
        %v135 = vld [vmem:[%s134] sm:$0x1]
        %136 = vst [vmem:[%s116 + $0x3] sm:$0x1] %v135
        %s137 = sadd.s32 %s117, 4
        %s138 = sld [smem:[#allocation3 + %s137]]
        %s139 = scalar_lea.vmem [#allocation4], %s138
        %v140 = vld [vmem:[%s139] sm:$0x1]
        %141 = vst [vmem:[%s116 + $0x4] sm:$0x1] %v140
        %s142 = sadd.s32 %s117, 5
        %s143 = sld [smem:[#allocation3 + %s142]]
        %s144 = scalar_lea.vmem [#allocation4], %s143
        %v145 = vld [vmem:[%s144] sm:$0x1]
        %146 = vst [vmem:[%s116 + $0x5] sm:$0x1] %v145
        %s147 = sadd.s32 %s117, 6
        %s148 = sld [smem:[#allocation3 + %s147]]
        %s149 = scalar_lea.vmem [#allocation4], %s148
        %v150 = vld [vmem:[%s149] sm:$0x1]
        %151 = vst [vmem:[%s116 + $0x6] sm:$0x1] %v150
        %s152 = sadd.s32 %s117, 7
        %s153 = sld [smem:[#allocation3 + %s152]]
        %s154 = scalar_lea.vmem [#allocation4], %s153
        %v155 = vld [vmem:[%s154] sm:$0x1]
        %156 = vst [vmem:[%s116 + $0x7] sm:$0x1] %v155
        %s157 = sand.u32 %s52, 1
        %s158 = scalar_lea.sflag [#allocation6], %s157
        %s159 = sand.u32 %s52, 1
        %s160 = smul.addr %s159, 8
        %s161 = scalar_lea.vmem [#allocation7], %s160
        // Predicated region
        $region29: #{word_embedding_forward.1} parent=23 // pred_check
          %p162 = pneg %p62
        $region30: #{word_embedding_forward.1} parent=23 // pred_check_branch
          %164 = sbr.rel (%p162) target = $region32
        $region31: #{word_embedding_forward.1} parent=23 // pred_region
          %s166 = ssub.s32 128, 128
          %167 = vsyncadd %s158, %s166
          %s168 = smul.addr %s23, 128
          %s169 = scalar_lea.hbm %s2, %s168
          %s171 = sshll.u32 %s161, 4
          %s172 = int_to_ptr.vmem [resolvable:$true] %s171
          %174 = dma.vmem_to_hbm [thread:$0]  %s172, 128, %s169, %s158
        $region32: #{word_embedding_forward.1} parent=23 // pred_fallthru
          _
      $region24: #{word_embedding_forward.1} parent=5 // pred_fallthru
        _
      %p175 = scmp.le.s32.totalorder 2, %s18
      // Predicated region
      $region33: #{word_embedding_forward.1} parent=5 // pred_check
        %p176 = pneg %p175
      $region34: #{word_embedding_forward.1} parent=5 // pred_check_branch
        %178 = sbr.rel (%p176) target = $region36
      $region35: #{word_embedding_forward.1} parent=5 // pred_region
        %s179 = ssub.s32 %s18, 2
        // Predicated region
        $region37: #{word_embedding_forward.1} parent=35 // pred_check
          %p180 = pneg %p68
        $region38: #{word_embedding_forward.1} parent=35 // pred_check_branch
          %182 = sbr.rel (%p180) target = $region40
        $region39: #{word_embedding_forward.1} parent=35 // pred_region
          %s183 = sand.u32 %s53, 1
          %s184 = scalar_lea.sflag [#allocation6], %s183
          %s185 = sand.u32 %s53, 1
          %s186 = smul.addr %s185, 8
          %s187 = scalar_lea.vmem [#allocation7], %s186
          %188 = dma.done %s184, 128
        $region40: #{word_embedding_forward.1} parent=35 // pred_fallthru
          _
      $region36: #{word_embedding_forward.1} parent=5 // pred_fallthru
        _
    $region6: #{word_embedding_forward.1} parent=1 // loop_footer
      %s22 = sadd.s32 1, %s18
    $region7: #{word_embedding_forward.1} parent=1 // loop_footer_branch
      %17 = sbr.rel target = $region3
    $region8: #{word_embedding_forward.1} parent=1 // loop_exit
      _
    %189 = vsyncpa [#allocation5], 1
    %s190 = scalar_lea.sflag [#allocation5], 1
    %191 = vsyncpa %s190, 1
    %192 = vsyncpa [#allocation6], 1
    %s193 = scalar_lea.sflag [#allocation6], 1
    %194 = vsyncpa %s193, 1

</llo_original>
